<compile_context>
chip_gen: v6e
topology: v6e:2x2x1
jax: 0.10.0
libtpu: 0.0.40
codegen_flags: <defaults>
</compile_context>

<pallas_src>
import functools

import numpy as np
import jax
import jax.numpy as jnp
from jax.experimental import pallas as pl
from jax.experimental.pallas import tpu as pltpu


def _moving_avg_kernel(x_ref, halo_ref, o_ref, win_ref, *,
                       kernel_size, stride, pad, use_main, use_hi, tile_rows):
    """One (batch, time-tile) block of the edge-padded moving average.

    x_ref    : (1, blk_t, C)       un-padded input rows owned by this tile
    halo_ref : (1, 1, H, C)        pre-gathered, edge-clamped halo rows
    o_ref    : (1, tile_rows, C)   output rows of this tile
    win_ref  : (wlen, C) f32       VMEM scratch: this tile's padded window
    """
    k_sz = kernel_size

    # Assemble the padded sliding window in VMEM.  This is where the
    # edge-replication padding happens -- no padded array ever hits HBM.
    if pad > 0:
        win_ref[0:pad, :] = halo_ref[0, 0, 0:pad, :].astype(jnp.float32)
    win_ref[pad:pad + use_main, :] = x_ref[0, 0:use_main, :].astype(jnp.float32)
    if use_hi > 0:
        win_ref[pad + use_main:pad + use_main + use_hi, :] = (
            halo_ref[0, 0, pad:pad + use_hi, :].astype(jnp.float32))

    def tap(k):
        if stride == 1:
            return win_ref[k:k + tile_rows, :]
        # TODO(synk): stride > 1 uses a sublane-strided load; TEMPO only uses
        # stride == 1.  A contiguous load + phase decimation would be faster.
        return win_ref[pl.ds(k, tile_rows, stride=stride), :]

    # Per-tile f32 accumulation, initialized from tap 0 (no zeros init, no
    # whole-output accumulator), single store per tile.
    acc = tap(0)
    for k in range(1, k_sz):
        acc = acc + tap(k)
    o_ref[0, :, :] = (acc * (1.0 / k_sz)).astype(o_ref.dtype)


def _pick_tile_rows(l_out, stride, channels, kernel_size, itemsize,
                    max_tile_rows=None, budget_bytes=2 * 1024 * 1024):
    """Largest multiple-of-8 divisor of l_out whose tile fits a VMEM budget."""
    def tile_bytes(tl):
        wlen = (tl - 1) * stride + kernel_size
        # 2x for the auto double-buffered in/out blocks + window scratch + f32 acc.
        return (2 * (tl * stride + tl) * channels * itemsize
                + (wlen + tl) * channels * 4)

    cap = l_out if max_tile_rows is None else min(l_out, max_tile_rows)
    divs = [d for d in range(8, min(cap, 4096) + 1, 8) if l_out % d == 0]
    if not divs:
        return l_out                       # no aligned divisor: single tile
    fitting = [d for d in divs if tile_bytes(d) <= budget_bytes]
    return max(fitting) if fitting else min(divs)


def moving_avg(x: jax.Array, kernel_size: int, stride: int = 1, *,
               max_tile_rows: int | None = None) -> jax.Array:
    """Equivalent of TEMPO's moving_avg.forward. x: (B, L, C) -> (B, L_out, C)."""
    B, L, C = x.shape
    K = int(kernel_size)
    s = int(stride)
    pad = (K - 1) // 2
    l_out = (L + 2 * pad - K) // s + 1
    assert l_out >= 1, "sequence too short for this kernel_size/stride"

    tl = _pick_tile_rows(l_out, s, C, K, x.dtype.itemsize, max_tile_rows)
    T = pl.cdiv(l_out, tl)                 # exact: tl divides l_out or tl == l_out
    M = tl * s                             # input rows owned by one tile
    wlen = (tl - 1) * s + K                # padded window rows per tile

    # Rare configs (stride > K - 2*pad) read a few rows past L; extend with
    # replicated last rows.  Never triggers for TEMPO's stride == 1 usage.
    overhang = max(0, T * M - L)
    if overhang > 0:
        x_main = jnp.concatenate(
            [x, jnp.repeat(x[:, -1:, :], overhang, axis=1)], axis=1)
    else:
        x_main = x
    L_arr = x_main.shape[1]
    blk_t = L_arr if T == 1 else M

    use_main = min(blk_t, wlen - pad)
    use_hi = wlen - pad - use_main
    H = max(1, pad + use_hi)

    # Pre-gather only the halo rows (edge-clamped indices implement the
    # replication pad).  This reads ~(K-1) rows per tile, not the whole array.
    idx = np.zeros((T, H), dtype=np.int32)
    for t in range(T):
        for p in range(pad):
            idx[t, p] = min(max(t * M - pad + p, 0), L - 1)
        for q in range(use_hi):
            idx[t, pad + q] = min(max(t * M + use_main + q, 0), L - 1)
    halo = jnp.take(x, jnp.asarray(idx.reshape(-1)), axis=1).reshape(B, T, H, C)

    kernel = functools.partial(
        _moving_avg_kernel, kernel_size=K, stride=s, pad=pad,
        use_main=use_main, use_hi=use_hi, tile_rows=tl)

    grid_spec = pltpu.PrefetchScalarGridSpec(
        num_scalar_prefetch=0,
        grid=(B, T),
        in_specs=[
            pl.BlockSpec((1, blk_t, C), lambda b, t: (b, t, 0)),
            pl.BlockSpec((1, 1, H, C), lambda b, t: (b, t, 0, 0)),
        ],
        out_specs=pl.BlockSpec((1, tl, C), lambda b, t: (b, t, 0)),
        scratch_shapes=[pltpu.VMEM((wlen, C), jnp.float32)],
    )

    return pl.pallas_call(
        kernel,
        out_shape=jax.ShapeDtypeStruct((B, l_out, C), x.dtype),
        grid_spec=grid_spec,
        compiler_params=pltpu.CompilerParams(
            dimension_semantics=("parallel", "parallel"),
            vmem_limit_bytes=32 * 1024 * 1024),
    )(x_main, halo)


def _moving_avg_ref(x: jax.Array, kernel_size: int, stride: int = 1) -> jax.Array:
    """Pure-JAX reference (mirrors the PyTorch module)."""
    pad = (kernel_size - 1) // 2
    front = jnp.repeat(x[:, :1, :], pad, axis=1)
    end = jnp.repeat(x[:, -1:, :], pad, axis=1)
    xp = jnp.concatenate([front, x, end], axis=1)
    Lp = xp.shape[1]
    l_out = (Lp - kernel_size) // stride + 1
    outs = []
    for t in range(l_out):
        outs.append(jnp.mean(xp[:, t * stride:t * stride + kernel_size, :], axis=1))
    return jnp.stack(outs, axis=1)


if __name__ == "__main__":
    key = jax.random.PRNGKey(0)

    # (B, L, C, kernel_size, stride, max_tile_rows)
    configs = [
        (2, 16, 64, 5, 1, None),   # typical small TEMPO decomposition setting
        (2, 96, 32, 25, 1, 32),    # large window, multi-tile grid (T=3) + halos
        (2, 64, 64, 4, 1, 16),     # even kernel_size -> asymmetric edge pad
    ]

    for i, (B, L, C, K, s, mtr) in enumerate(configs):
        x = jax.random.normal(jax.random.fold_in(key, i), (B, L, C),
                              dtype=jnp.float32)
        out = moving_avg(x, kernel_size=K, stride=s, max_tile_rows=mtr)
        out = jax.block_until_ready(out)
        ref = _moving_avg_ref(x, kernel_size=K, stride=s)
        assert out.shape == ref.shape, (out.shape, ref.shape)
        assert jnp.allclose(out, ref, atol=1e-5, rtol=1e-5), (
            f"mismatch vs reference for config {i}")

    print("KERNEL_OK")
</pallas_src>

<mosaic_0001>
module attributes {stable_mosaic.version = 11 : i64} {
  func.func @_moving_avg_kernel(%arg0: i32, %arg1: i32, %arg2: memref<1x16x64xf32, #tpu.memory_space<vmem>>, %arg3: memref<1x1x4x64xf32, #tpu.memory_space<vmem>>, %arg4: memref<1x16x64xf32, #tpu.memory_space<vmem>>, %arg5: memref<20x64xf32, #tpu.memory_space<vmem>>) attributes {dimension_semantics = [#tpu.dimension_semantics<parallel>, #tpu.dimension_semantics<parallel>], iteration_bounds = array<i64: 2, 1>, scalar_prefetch = 0 : i64, scratch_operands = 1 : i64, tpu.core_type = #tpu.core_type<tc>, window_params = [{transform_indices = @transform_0, window_bounds = array<i64: 1, 16, 64>}, {transform_indices = @transform_1, window_bounds = array<i64: 1, 1, 4, 64>}, {transform_indices = @transform_2, window_bounds = array<i64: 1, 16, 64>}]} {
    %c0 = arith.constant 0 : index
    %c0_0 = arith.constant 0 : index
    %c0_1 = arith.constant 0 : index
    %c0_2 = arith.constant 0 : index
    %0 = vector.load %arg3[%c0, %c0_0, %c0_1, %c0_2] : memref<1x1x4x64xf32, #tpu.memory_space<vmem>>, vector<1x1x2x64xf32>
    %1 = vector.shape_cast %0 : vector<1x1x2x64xf32> to vector<2x64xf32>
    %c0_3 = arith.constant 0 : index
    %c0_4 = arith.constant 0 : index
    %2 = vector.load %arg5[%c0_3, %c0_4] : memref<20x64xf32, #tpu.memory_space<vmem>>, vector<2x64xf32>
    tpu.vector_store %arg5[%c0_3, %c0_4], %1 {strides = array<i32>} : memref<20x64xf32, #tpu.memory_space<vmem>>, vector<2x64xf32>,
    %c0_5 = arith.constant 0 : index
    %c0_6 = arith.constant 0 : index
    %c0_7 = arith.constant 0 : index
    %3 = vector.load %arg2[%c0_5, %c0_6, %c0_7] : memref<1x16x64xf32, #tpu.memory_space<vmem>>, vector<1x16x64xf32>
    %4 = vector.shape_cast %3 : vector<1x16x64xf32> to vector<16x64xf32>
    %c2 = arith.constant 2 : index
    %c0_8 = arith.constant 0 : index
    %5 = vector.load %arg5[%c2, %c0_8] : memref<20x64xf32, #tpu.memory_space<vmem>>, vector<16x64xf32>
    tpu.vector_store %arg5[%c2, %c0_8], %4 {strides = array<i32>} : memref<20x64xf32, #tpu.memory_space<vmem>>, vector<16x64xf32>,
    %c0_9 = arith.constant 0 : index
    %c0_10 = arith.constant 0 : index
    %c2_11 = arith.constant 2 : index
    %c0_12 = arith.constant 0 : index
    %6 = vector.load %arg3[%c0_9, %c0_10, %c2_11, %c0_12] : memref<1x1x4x64xf32, #tpu.memory_space<vmem>>, vector<1x1x2x64xf32>
    %7 = vector.shape_cast %6 : vector<1x1x2x64xf32> to vector<2x64xf32>
    %c18 = arith.constant 18 : index
    %c0_13 = arith.constant 0 : index
    %8 = vector.load %arg5[%c18, %c0_13] : memref<20x64xf32, #tpu.memory_space<vmem>>, vector<2x64xf32>
    tpu.vector_store %arg5[%c18, %c0_13], %7 {strides = array<i32>} : memref<20x64xf32, #tpu.memory_space<vmem>>, vector<2x64xf32>,
    %c0_14 = arith.constant 0 : index
    %c0_15 = arith.constant 0 : index
    %9 = vector.load %arg5[%c0_14, %c0_15] : memref<20x64xf32, #tpu.memory_space<vmem>>, vector<16x64xf32>
    %c1 = arith.constant 1 : index
    %c0_16 = arith.constant 0 : index
    %10 = vector.load %arg5[%c1, %c0_16] : memref<20x64xf32, #tpu.memory_space<vmem>>, vector<16x64xf32>
    %11 = arith.addf %9, %10 : vector<16x64xf32>
    %c2_17 = arith.constant 2 : index
    %c0_18 = arith.constant 0 : index
    %12 = vector.load %arg5[%c2_17, %c0_18] : memref<20x64xf32, #tpu.memory_space<vmem>>, vector<16x64xf32>
    %13 = arith.addf %11, %12 : vector<16x64xf32>
    %c3 = arith.constant 3 : index
    %c0_19 = arith.constant 0 : index
    %14 = vector.load %arg5[%c3, %c0_19] : memref<20x64xf32, #tpu.memory_space<vmem>>, vector<16x64xf32>
    %15 = arith.addf %13, %14 : vector<16x64xf32>
    %c4 = arith.constant 4 : index
    %c0_20 = arith.constant 0 : index
    %16 = vector.load %arg5[%c4, %c0_20] : memref<20x64xf32, #tpu.memory_space<vmem>>, vector<16x64xf32>
    %17 = arith.addf %15, %16 : vector<16x64xf32>
    %cst = arith.constant 2.000000e-01 : f32
    %18 = vector.broadcast %cst : f32 to vector<16x64xf32>
    %19 = arith.mulf %17, %18 : vector<16x64xf32>
    %c0_21 = arith.constant 0 : index
    %c0_22 = arith.constant 0 : index
    %c0_23 = arith.constant 0 : index
    %20 = vector.load %arg4[%c0_21, %c0_22, %c0_23] : memref<1x16x64xf32, #tpu.memory_space<vmem>>, vector<1x16x64xf32>
    %21 = vector.shape_cast %20 : vector<1x16x64xf32> to vector<16x64xf32>
    %22 = vector.shape_cast %19 : vector<16x64xf32> to vector<1x16x64xf32>
    tpu.vector_store %arg4[%c0_21, %c0_22, %c0_23], %22 {strides = array<i32>} : memref<1x16x64xf32, #tpu.memory_space<vmem>>, vector<1x16x64xf32>,
    return
  }
  func.func @transform_0(%arg0: i32, %arg1: i32) -> (i32, i32, i32) {
    %c0_i32 = arith.constant 0 : i32
    %c0_i32_0 = arith.constant 0 : i32
    return %arg0, %arg1, %c0_i32 : i32, i32, i32
  }
  func.func @transform_1(%arg0: i32, %arg1: i32) -> (i32, i32, i32, i32) {
    %c0_i32 = arith.constant 0 : i32
    %c0_i32_0 = arith.constant 0 : i32
    %c0_i32_1 = arith.constant 0 : i32
    return %arg0, %arg1, %c0_i32, %c0_i32_0 : i32, i32, i32, i32
  }
  func.func @transform_2(%arg0: i32, %arg1: i32) -> (i32, i32, i32) {
    %c0_i32 = arith.constant 0 : i32
    %c0_i32_0 = arith.constant 0 : i32
    return %arg0, %arg1, %c0_i32 : i32, i32, i32
  }
}

</mosaic_0001>

<llo_original>
// kernel: tpu_custom_call.1
$region0: #{tpu_custom_call.1}
  #allocation0 [shape = 'u32[]', space=smem, size = 0x4, offset = 0x4, fixed_abs, tag = 'smem constant byte address 0x4 - core index']
  #allocation1 [shape = 'u32[144,128]{1,0:T(1,128)}', space=vmem, size = 0x12000, scoped, tag = 'internal scratch']
  #allocation2 [shape = 'f32[20,64]{1,0:T(8,128)}', space=vmem, size = 0x3000, scoped, tag = 'scratch operand']
  %s0 = inlined_call_operand.hbm [shape: f32[2,16,64], index: 0, kind: input, shape index: {}]
  %s1 = inlined_call_operand.hbm [shape: f32[2,1,4,64], index: 1, kind: input, shape index: {}]
  %s2 = inlined_call_operand.hbm [shape: f32[2,16,64], index: 2, kind: output, shape index: {}]
  %s3 = sld [smem:[#allocation0]]
  $region49: #{tpu_custom_call.1} parent=0
    _
  %s5 = ssub.s32 1, %s3
  %s6 = scalar_select 0, %s5, %s3
  $region1: #{tpu_custom_call.1} parent=0
    #allocation3 [shape = 'u8[16384]{0}', space=vmem, size = 0x4000, scoped, tag = 'input window, operand 0']
    #allocation4 [shape = 's32[2]{0}', space=sflag, size = 0x8, scoped, tag = 'scoped memory for tpu_custom_call.1']
    #allocation5 [shape = 's32[2]{0}', space=sflag, size = 0x8, scoped, tag = 'scoped memory for tpu_custom_call.1']
    #allocation6 [shape = 'u8[4096]{0}', space=vmem, size = 0x1000, scoped, tag = 'input window, operand 1']
    #allocation7 [shape = 's32[2]{0}', space=sflag, size = 0x8, scoped, tag = 'scoped memory for tpu_custom_call.1']
    #allocation8 [shape = 'u8[16384]{0}', space=vmem, size = 0x4000, scoped, tag = 'output window, operand 0']
    %7 = vsyncpa [#allocation4], 0
    %s8 = scalar_lea.sflag [#allocation4], 1
    %9 = vsyncpa %s8, 0
    %10 = vsyncpa [#allocation7], 0
    %s11 = scalar_lea.sflag [#allocation7], 1
    %12 = vsyncpa %s11, 0
    %13 = vsyncpa [#allocation5], 0
    %s14 = scalar_lea.sflag [#allocation5], 1
    %15 = vsyncpa %s14, 0
    loop: start=0, step=1, limit=4
    $region2: #{tpu_custom_call.1} parent=1 // loop_pre_header
      _
    $region3: #{tpu_custom_call.1} parent=1 // loop_header
      %s17 = sphi 0, %s21
      %p18 = scmp.ge.s32.totalorder %s17, 4
      %s24 = sphi 0, %s36
      %s25 = sphi 0, %s32
      %s26 = sphi 0, %s24
      %s27 = sphi 0, %s25
      %s28 = sphi 0, %s26
      %s29 = sphi 0, %s27
      %s41 = sphi 0, %s43
      %s44 = sphi 0, %s41
      %s45 = sphi 0, %s44
      %s61 = sphi 0, %s45
      %s69 = sphi 0, %s71
      %s72 = sphi 0, %s69
      %s73 = sphi 0, %s72
      %s89 = sphi 0, %s73
      %s97 = sphi 0, %s99
      %s100 = sphi 0, %s97
      %s101 = sphi 0, %s100
      %s117 = sphi 0, %s101
    $region4: #{tpu_custom_call.1} parent=1 // loop_header_branch
      %20 = sbr.rel (%p18) target = $region8
    $region5: #{tpu_custom_call.1} parent=1 // loop_body
      %s22 = ssub.s32 %s17, 1
      %s23 = ssub.s32 %s17, 2
      %s30 = sadd.s32 1, %s25
      %p31 = scmp.ge.s32.totalorder %s30, 1
      %s32 = scalar_select %p31, 0, %s30
      %s33 = sadd.s32 1, %s24
      %s34 = scalar_select %p31, %s33, %s24
      %p35 = scmp.ge.s32.totalorder %s34, 2
      %s36 = scalar_select %p35, 0, %s34
      %s37 = ssub.s32 %s24, %s36
      %s38 = ssub.s32 %s25, %s32
      %s39 = sor.u32 %s37, %s38
      %p40 = scmp.eq.s32.totalorder %s39, 0
      %s42 = sadd.s32 %s41, 1
      %s43 = scalar_select %p40, %s41, %s42
      %p46 = pneg %p40
      %p47 = scmp.eq.s32.totalorder %s17, 1
      %p48 = por %p46, %p47
      %p49 = scmp.ne.s32.totalorder %s41, %s44
      %p50 = scmp.eq.s32.totalorder %s17, 0
      %p51 = por %p49, %p50
      %p52 = scmp.ne.s32.totalorder %s41, %s44
      %p53 = scmp.eq.s32.totalorder %s22, 1
      %p54 = por %p52, %p53
      %p55 = scmp.ne.s32.totalorder %s44, %s45
      %p56 = scmp.eq.s32.totalorder %s22, 0
      %p57 = por %p55, %p56
      %p58 = scmp.ne.s32.totalorder %s44, %s45
      %p59 = scmp.eq.s32.totalorder %s23, 1
      %p60 = por %p58, %p59
      %p62 = scmp.ne.s32.totalorder %s45, %s61
      %p63 = scmp.eq.s32.totalorder %s23, 0
      %p64 = por %p62, %p63
      %s65 = ssub.s32 %s24, %s36
      %s66 = ssub.s32 %s25, %s32
      %s67 = sor.u32 %s65, %s66
      %p68 = scmp.eq.s32.totalorder %s67, 0
      %s70 = sadd.s32 %s69, 1
      %s71 = scalar_select %p68, %s69, %s70
      %p74 = pneg %p68
      %p75 = scmp.eq.s32.totalorder %s17, 1
      %p76 = por %p74, %p75
      %p77 = scmp.ne.s32.totalorder %s69, %s72
      %p78 = scmp.eq.s32.totalorder %s17, 0
      %p79 = por %p77, %p78
      %p80 = scmp.ne.s32.totalorder %s69, %s72
      %p81 = scmp.eq.s32.totalorder %s22, 1
      %p82 = por %p80, %p81
      %p83 = scmp.ne.s32.totalorder %s72, %s73
      %p84 = scmp.eq.s32.totalorder %s22, 0
      %p85 = por %p83, %p84
      %p86 = scmp.ne.s32.totalorder %s72, %s73
      %p87 = scmp.eq.s32.totalorder %s23, 1
      %p88 = por %p86, %p87
      %p90 = scmp.ne.s32.totalorder %s73, %s89
      %p91 = scmp.eq.s32.totalorder %s23, 0
      %p92 = por %p90, %p91
      %s93 = ssub.s32 %s24, %s36
      %s94 = ssub.s32 %s25, %s32
      %s95 = sor.u32 %s93, %s94
      %p96 = scmp.eq.s32.totalorder %s95, 0
      %s98 = sadd.s32 %s97, 1
      %s99 = scalar_select %p96, %s97, %s98
      %p102 = pneg %p96
      %p103 = scmp.eq.s32.totalorder %s17, 1
      %p104 = por %p102, %p103
      %p105 = scmp.ne.s32.totalorder %s97, %s100
      %p106 = scmp.eq.s32.totalorder %s17, 0
      %p107 = por %p105, %p106
      %p108 = scmp.ne.s32.totalorder %s97, %s100
      %p109 = scmp.eq.s32.totalorder %s22, 1
      %p110 = por %p108, %p109
      %p111 = scmp.ne.s32.totalorder %s100, %s101
      %p112 = scmp.eq.s32.totalorder %s22, 0
      %p113 = por %p111, %p112
      %p114 = scmp.ne.s32.totalorder %s100, %s101
      %p115 = scmp.eq.s32.totalorder %s23, 1
      %p116 = por %p114, %p115
      %p118 = scmp.ne.s32.totalorder %s101, %s117
      %p119 = scmp.eq.s32.totalorder %s23, 0
      %p120 = por %p118, %p119
      %p121 = scmp.le.s32.totalorder 1, %s17
      %p122 = scmp.lt.s32.totalorder %s17, 3
      %p123 = pnand %p121, %p122
      %p124 = pneg %p123
      // Predicated region
      $region9: #{tpu_custom_call.1} parent=5 // pred_check
        _
      $region10: #{tpu_custom_call.1} parent=5 // pred_check_branch
        %126 = sbr.rel (%p123) target = $region12
      $region11: #{tpu_custom_call.1} parent=5 // pred_region
        %s127 = ssub.s32 %s17, 1
      $region12: #{tpu_custom_call.1} parent=5 // pred_fallthru
        _
      %p128 = scmp.lt.s32.totalorder %s17, 2
      // Predicated region
      $region13: #{tpu_custom_call.1} parent=5 // pred_check
        %p129 = pneg %p128
      $region14: #{tpu_custom_call.1} parent=5 // pred_check_branch
        %131 = sbr.rel (%p129) target = $region16
      $region15: #{tpu_custom_call.1} parent=5 // pred_region
        // Predicated region
        $region17: #{tpu_custom_call.1} parent=15 // pred_check
          %p132 = pneg %p51
        $region18: #{tpu_custom_call.1} parent=15 // pred_check_branch
          %134 = sbr.rel (%p132) target = $region20
        $region19: #{tpu_custom_call.1} parent=15 // pred_region
          %s135 = sand.u32 %s41, 1
          %s136 = scalar_lea.sflag [#allocation4], %s135
          %s137 = sand.u32 %s41, 1
          %s138 = smul.addr %s137, 16
          %s139 = scalar_lea.vmem [#allocation3], %s138
          %s140 = smul.u32 2, %s25
          %s142 = ssub.s32 256, 256
          %143 = vsyncadd %s136, %s142
          %s144 = smul.addr %s24, 2
          %s145 = sadd.s32 %s140, %s144
          %s146 = smul.addr %s145, 128
          %s147 = scalar_lea.hbm %s0, %s146
          %s148 = sshll.u32 %s139, 4
          %s149 = int_to_ptr.vmem [resolvable:$true] %s148
          %154 = dma.hbm_to_vmem [thread:$0]  %s147, 256, %s149, %s136, 128, 128, 8
        $region20: #{tpu_custom_call.1} parent=15 // pred_fallthru
          _
        // Predicated region
        $region21: #{tpu_custom_call.1} parent=15 // pred_check
          %p155 = pneg %p79
        $region22: #{tpu_custom_call.1} parent=15 // pred_check_branch
          %157 = sbr.rel (%p155) target = $region24
        $region23: #{tpu_custom_call.1} parent=15 // pred_region
          %s158 = sand.u32 %s69, 1
          %s159 = scalar_lea.sflag [#allocation7], %s158
          %s160 = sand.u32 %s69, 1
          %s161 = smul.addr %s160, 4
          %s162 = scalar_lea.vmem [#allocation6], %s161
          %s164 = ssub.s32 64, 64
          %165 = vsyncadd %s159, %s164
          %s166 = sadd.s32 %s25, %s24
          %s167 = smul.addr %s166, 64
          %s168 = scalar_lea.hbm %s1, %s167
          %s170 = sshll.u32 %s162, 4
          %s171 = int_to_ptr.vmem [resolvable:$true] %s170
          %173 = dma.hbm_to_vmem [thread:$0]  %s168, 64, %s171, %s159
        $region24: #{tpu_custom_call.1} parent=15 // pred_fallthru
          _
      $region16: #{tpu_custom_call.1} parent=5 // pred_fallthru
        _
      %p174 = scmp.le.s32.totalorder 1, %s17
      %p175 = scmp.lt.s32.totalorder %s17, 3
      %p176 = pnand %p174, %p175
      %p177 = pneg %p176
      // Predicated region
      $region25: #{tpu_custom_call.1} parent=5 // pred_check
        _
      $region26: #{tpu_custom_call.1} parent=5 // pred_check_branch
        %179 = sbr.rel (%p176) target = $region28
      $region27: #{tpu_custom_call.1} parent=5 // pred_region
        %s180 = ssub.s32 %s17, 1
        %s181 = sand.u32 %s44, 1
        %s182 = scalar_lea.sflag [#allocation4], %s181
        %s183 = sand.u32 %s44, 1
        %s184 = smul.addr %s183, 16
        %s185 = scalar_lea.vmem [#allocation3], %s184
        // Predicated region
        $region29: #{tpu_custom_call.1} parent=27 // pred_check
          %p186 = pneg %p57
        $region30: #{tpu_custom_call.1} parent=27 // pred_check_branch
          %188 = sbr.rel (%p186) target = $region32
        $region31: #{tpu_custom_call.1} parent=27 // pred_region
          %189 = dma.done %s182, 256
        $region32: #{tpu_custom_call.1} parent=27 // pred_fallthru
          _
        %s190 = sand.u32 %s72, 1
        %s191 = scalar_lea.sflag [#allocation7], %s190
        %s192 = sand.u32 %s72, 1
        %s193 = smul.addr %s192, 4
        %s194 = scalar_lea.vmem [#allocation6], %s193
        // Predicated region
        $region33: #{tpu_custom_call.1} parent=27 // pred_check
          %p195 = pneg %p85
        $region34: #{tpu_custom_call.1} parent=27 // pred_check_branch
          %197 = sbr.rel (%p195) target = $region36
        $region35: #{tpu_custom_call.1} parent=27 // pred_region
          %198 = dma.done %s191, 64
        $region36: #{tpu_custom_call.1} parent=27 // pred_fallthru
          _
        %s199 = sand.u32 %s44, 1
        %s200 = scalar_lea.sflag [#allocation4], %s199
        %s201 = sand.u32 %s44, 1
        %s202 = smul.addr %s201, 16
        %s203 = scalar_lea.vmem [#allocation3], %s202
        %p204 = pneg %p57
        %p205 = pneg %p54
        %s206 = sand.u32 %s72, 1
        %s207 = scalar_lea.sflag [#allocation7], %s206
        %s208 = sand.u32 %s72, 1
        %s209 = smul.addr %s208, 4
        %s210 = scalar_lea.vmem [#allocation6], %s209
        %p211 = pneg %p85
        %p212 = pneg %p82
        %p213 = pneg %p113
        %p214 = pneg %p110
        %s215 = sand.u32 %s100, 1
        %s216 = scalar_lea.sflag [#allocation5], %s215
        %s217 = sand.u32 %s100, 1
        %s218 = smul.addr %s217, 16
        %s219 = scalar_lea.vmem [#allocation8], %s218
        %s220 = smul.u32 2, %s27
        %s221 = smul.u32 2, %s27
        %v222 = vld [vmem:[%s194] sm:$0x3]
        %vm223 = vcmask 517120
        %224 = vst.msk [vmem:[#allocation2] sm:$0x3] %vm223, %v222
        %v225 = vld [vmem:[%s185] sm:$0xff]
        %v226 = vld [vmem:[%s185 + $0x8] sm:$0xff]
        %vm227 = vcmask 523264
        %228 = vst.msk [vmem:[#allocation2 + $0x2] sm:$0xff] %vm227, %v225
        %229 = vst.msk [vmem:[#allocation2 + $0xa] sm:$0xff] %vm227, %v226
        %v230 = vld [vmem:[%s194 + $0x2] sm:$0x3]
        %231 = vst.msk [vmem:[#allocation2 + $0x12] sm:$0x3] %vm223, %v230
        %v232 = vld [vmem:[#allocation2] sm:$0xff]
        %v233 = vld [vmem:[#allocation2 + $0x8] sm:$0xff]
        %v234 = vld [vmem:[#allocation2 + $0x1] sm:$0xff]
        %v235 = vld [vmem:[#allocation2 + $0x9] sm:$0xff]
        %v236 = vadd.f32 %v232, %v234
        %v237 = vadd.f32 %v233, %v235
        %v238 = vld [vmem:[#allocation2 + $0x2] sm:$0xff]
        %v239 = vld [vmem:[#allocation2 + $0xa] sm:$0xff]
        %v240 = vadd.f32 %v236, %v238
        %v241 = vadd.f32 %v237, %v239
        %v242 = vld [vmem:[#allocation2 + $0x3] sm:$0xff]
        %v243 = vld [vmem:[#allocation2 + $0xb] sm:$0xff]
        %v244 = vadd.f32 %v240, %v242
        %v245 = vadd.f32 %v241, %v243
        %v246 = vld [vmem:[#allocation2 + $0x4] sm:$0xff]
        %v247 = vld [vmem:[#allocation2 + $0xc] sm:$0xff]
        %v248 = vadd.f32 %v244, %v246
        %v249 = vadd.f32 %v245, %v247
        %v250 = vmul.f32 %v248, 0.2
        %v251 = vmul.f32 %v249, 0.2
        %252 = vst.msk [vmem:[%s219] sm:$0xff] %vm227, %v250
        %253 = vst.msk [vmem:[%s219 + $0x8] sm:$0xff] %vm227, %v251
        %s254 = sand.u32 %s100, 1
        %s255 = scalar_lea.sflag [#allocation5], %s254
        %s256 = sand.u32 %s100, 1
        %s257 = smul.addr %s256, 16
        %s258 = scalar_lea.vmem [#allocation8], %s257
        // Predicated region
        $region37: #{tpu_custom_call.1} parent=27 // pred_check
          %p259 = pneg %p110
        $region38: #{tpu_custom_call.1} parent=27 // pred_check_branch
          %261 = sbr.rel (%p259) target = $region40
        $region39: #{tpu_custom_call.1} parent=27 // pred_region
          %s262 = smul.u32 2, %s27
          %s264 = ssub.s32 256, 256
          %265 = vsyncadd %s255, %s264
          %s266 = smul.addr %s26, 2
          %s267 = sadd.s32 %s262, %s266
          %s268 = smul.addr %s267, 128
          %s269 = scalar_lea.hbm %s2, %s268
          %s270 = sshll.u32 %s258, 4
          %s271 = int_to_ptr.vmem [resolvable:$true] %s270
          %276 = dma.vmem_to_hbm [thread:$0]  %s271, 256, %s269, %s255, 128, 128, 8
        $region40: #{tpu_custom_call.1} parent=27 // pred_fallthru
          _
      $region28: #{tpu_custom_call.1} parent=5 // pred_fallthru
        _
      %p277 = scmp.le.s32.totalorder 2, %s17
      // Predicated region
      $region41: #{tpu_custom_call.1} parent=5 // pred_check
        %p278 = pneg %p277
      $region42: #{tpu_custom_call.1} parent=5 // pred_check_branch
        %280 = sbr.rel (%p278) target = $region44
      $region43: #{tpu_custom_call.1} parent=5 // pred_region
        %s281 = ssub.s32 %s17, 2
        // Predicated region
        $region45: #{tpu_custom_call.1} parent=43 // pred_check
          %p282 = pneg %p116
        $region46: #{tpu_custom_call.1} parent=43 // pred_check_branch
          %284 = sbr.rel (%p282) target = $region48
        $region47: #{tpu_custom_call.1} parent=43 // pred_region
          %s285 = sand.u32 %s101, 1
          %s286 = scalar_lea.sflag [#allocation5], %s285
          %s287 = sand.u32 %s101, 1
          %s288 = smul.addr %s287, 16
          %s289 = scalar_lea.vmem [#allocation8], %s288
          %290 = dma.done %s286, 256
        $region48: #{tpu_custom_call.1} parent=43 // pred_fallthru
          _
      $region44: #{tpu_custom_call.1} parent=5 // pred_fallthru
        _
    $region6: #{tpu_custom_call.1} parent=1 // loop_footer
      %s21 = sadd.s32 1, %s17
    $region7: #{tpu_custom_call.1} parent=1 // loop_footer_branch
      %16 = sbr.rel target = $region3
    $region8: #{tpu_custom_call.1} parent=1 // loop_exit
      _
    %291 = vsyncpa [#allocation4], 1
    %s292 = scalar_lea.sflag [#allocation4], 1
    %293 = vsyncpa %s292, 1
    %294 = vsyncpa [#allocation7], 1
    %s295 = scalar_lea.sflag [#allocation7], 1
    %296 = vsyncpa %s295, 1
    %297 = vsyncpa [#allocation5], 1
    %s298 = scalar_lea.sflag [#allocation5], 1
    %299 = vsyncpa %s298, 1

</llo_original>
